<compile_context>
chip_gen: v6e
topology: v6e:2x2x1
jax: 0.10.0
libtpu: 0.0.40
codegen_flags: <defaults>
</compile_context>

<pallas_src>
import jax
import jax.numpy as jnp
import numpy as np
from jax.experimental import pallas as pl
from jax.experimental.pallas import tpu as pltpu


def _round_up(x: int, m: int) -> int:
    return ((x + m - 1) // m) * m


# ----------------------------------------------------------------------------
# Kernel: full 4-layer MLP for one (tile_b, :) batch tile. All weights/biases
# are VMEM-resident (constant index_map); activations never leave VMEM.
# ----------------------------------------------------------------------------
def _soft_q_kernel(xa_ref,
                   w1_ref, b1_ref,
                   w2_ref, b2_ref,
                   w3_ref, b3_ref,
                   w4_ref, b4_ref,
                   out_ref):
    bf16 = jnp.bfloat16
    f32 = jnp.float32

    # Layer 1: single K=(obs+act) bf16 MXU matmul, f32 accumulation; bias +
    # ReLU in f32 on the VPU. xa_ref is already bf16 (cast in the wrapper).
    h = jnp.dot(xa_ref[...], w1_ref[...], preferred_element_type=f32) + b1_ref[...]
    h = jnp.maximum(h, 0.0)

    # Layer 2.
    h = jnp.dot(h.astype(bf16), w2_ref[...], preferred_element_type=f32) + b2_ref[...]
    h = jnp.maximum(h, 0.0)

    # Layer 3.
    h = jnp.dot(h.astype(bf16), w3_ref[...], preferred_element_type=f32) + b3_ref[...]
    h = jnp.maximum(h, 0.0)

    # Layer 4 (256 -> 1): VPU multiply by the f32 weight row + lane-axis
    # reduce. No transpose, no N=1 MXU matmul; output block is (tile_b, 1).
    q = jnp.sum(h * w4_ref[...], axis=-1, keepdims=True) + b4_ref[...]
    out_ref[...] = q.astype(out_ref.dtype)


# ----------------------------------------------------------------------------
# Wrapper: batch grid, pinned weights, (B_pad, 1) output.
# ----------------------------------------------------------------------------
def soft_q_forward(x, a, params):
    """x: (B, obs_dim), a: (B, act_dim) -> (B, 1) Q-values."""
    w1, b1, w2, b2, w3, b3, w4, b4 = params
    B = x.shape[0]
    in_dim = w1.shape[0]
    hidden = w2.shape[0]
    assert x.shape[1] + a.shape[1] == in_dim

    # torch.cat([x, a], 1) + bf16 cast done once here (tiny, XLA-fusable);
    # this is the only per-step streamed HBM traffic, so halve its bytes.
    xa = jnp.concatenate([x, a], axis=1).astype(jnp.bfloat16)

    # Adaptive batch tile: big tiles amortize the ~0.35 us per-step overhead;
    # but keep >= 2 grid steps when the batch allows it so both v7x
    # TensorCores get work under dimension_semantics=("parallel",).
    b_pad_min = _round_up(max(B, 1), 128)
    tile_b = min(2048, b_pad_min)
    if b_pad_min >= 256:
        tile_b = min(tile_b, _round_up(b_pad_min // 2, 128))
    B_pad = _round_up(b_pad_min, tile_b)
    if B_pad != B:
        xa = jnp.pad(xa, ((0, B_pad - B), (0, 0)))
    num_tiles = B_pad // tile_b

    batch_map = lambda i: (i, 0)   # tiles march down the batch axis
    pinned = lambda i: (0, 0)      # weights/biases stay resident in VMEM

    flops = 2 * B_pad * (in_dim * hidden + 2 * hidden * hidden + hidden)
    bytes_accessed = (int(xa.size) * 2 + B_pad * 4
                      + sum(int(p.size) * p.dtype.itemsize for p in params))

    out = pl.pallas_call(
        _soft_q_kernel,
        out_shape=jax.ShapeDtypeStruct((B_pad, 1), jnp.float32),
        grid=(num_tiles,),
        in_specs=[
            pl.BlockSpec((tile_b, in_dim), batch_map),   # x||a tile, bf16
            pl.BlockSpec((in_dim, hidden), pinned),      # W1, bf16
            pl.BlockSpec((1, hidden), pinned),           # b1, f32
            pl.BlockSpec((hidden, hidden), pinned),      # W2, bf16
            pl.BlockSpec((1, hidden), pinned),           # b2, f32
            pl.BlockSpec((hidden, hidden), pinned),      # W3, bf16
            pl.BlockSpec((1, hidden), pinned),           # b3, f32
            pl.BlockSpec((1, hidden), pinned),           # W4 row, f32
            pl.BlockSpec((1, 1), pinned),                # b4, f32
        ],
        out_specs=pl.BlockSpec((tile_b, 1), lambda i: (i, 0)),
        compiler_params=pltpu.CompilerParams(
            dimension_semantics=("parallel",),           # megacore on v7x
            vmem_limit_bytes=32 * 1024 * 1024),          # explicit, v7x-safe
        cost_estimate=pl.CostEstimate(flops=int(flops), transcendentals=0,
                                      bytes_accessed=int(bytes_accessed)),
    )(xa, w1, b1, w2, b2, w3, b3, w4, b4)

    # Padded rows carry garbage Q values (from the biases); slice them off.
    return out[:B]


# ----------------------------------------------------------------------------
# Deterministic parameter init mirroring the module shapes. Layers 1-3 use a
# scaled-normal stand-in for torch's default Linear init (stored bf16 for the
# MXU); the final layer mimics layer_init(std=0.01): unit-norm row * 0.01 with
# zero bias (kept f32 for the VPU path). Weights stored transposed as
# (in_features, out_features) so the kernel computes y = x @ W + b.
# ----------------------------------------------------------------------------
def init_params(key, obs_dim, act_dim, hidden=256):
    ks = jax.random.split(key, 4)
    in_dim = obs_dim + act_dim

    def dense_w(k, fan_in, fan_out):
        scale = 1.0 / np.sqrt(fan_in)
        w = scale * jax.random.normal(k, (fan_in, fan_out), dtype=jnp.float32)
        return w.astype(jnp.bfloat16)

    w1 = dense_w(ks[0], in_dim, hidden)
    b1 = jnp.zeros((1, hidden), jnp.float32)
    w2 = dense_w(ks[1], hidden, hidden)
    b2 = jnp.zeros((1, hidden), jnp.float32)
    w3 = dense_w(ks[2], hidden, hidden)
    b3 = jnp.zeros((1, hidden), jnp.float32)

    v = jax.random.normal(ks[3], (1, hidden), dtype=jnp.float32)
    w4 = 0.01 * v / jnp.linalg.norm(v)     # orthogonal-row init, std=0.01
    b4 = jnp.zeros((1, 1), jnp.float32)
    return (w1, b1, w2, b2, w3, b3, w4, b4)


# Pure-JAX reference with the same bf16-matmul / f32-accumulate numerics.
def reference_forward(x, a, params):
    w1, b1, w2, b2, w3, b3, w4, b4 = params
    bf16, f32 = jnp.bfloat16, jnp.float32
    xa = jnp.concatenate([x, a], axis=1).astype(bf16)
    h = jnp.maximum(jnp.dot(xa, w1, preferred_element_type=f32) + b1, 0.0)
    h = jnp.maximum(jnp.dot(h.astype(bf16), w2, preferred_element_type=f32) + b2, 0.0)
    h = jnp.maximum(jnp.dot(h.astype(bf16), w3, preferred_element_type=f32) + b3, 0.0)
    return jnp.sum(h * w4, axis=-1, keepdims=True) + b4


if __name__ == "__main__":
    # Small shapes consistent with a flat-obs continuous-control env.
    batch, obs_dim, act_dim = 8, 32, 8

    key = jax.random.PRNGKey(0)
    k_obs, k_act, k_params = jax.random.split(key, 3)

    x = jax.random.normal(k_obs, (batch, obs_dim), dtype=jnp.float32)
    a = jax.random.normal(k_act, (batch, act_dim), dtype=jnp.float32)
    params = init_params(k_params, obs_dim, act_dim)

    q = jax.block_until_ready(soft_q_forward(x, a, params))
    q_ref = reference_forward(x, a, params)

    assert q.shape == (batch, 1)
    np.testing.assert_allclose(np.asarray(q), np.asarray(q_ref),
                               rtol=2e-2, atol=1e-3)

    print("KERNEL_OK")
</pallas_src>

<mosaic_0001>
module attributes {stable_mosaic.version = 11 : i64} {
  func.func @_soft_q_kernel(%arg0: i32, %arg1: memref<128x40xbf16, #tpu.memory_space<vmem>>, %arg2: memref<40x256xbf16, #tpu.memory_space<vmem>>, %arg3: memref<1x256xf32, #tpu.memory_space<vmem>>, %arg4: memref<256x256xbf16, #tpu.memory_space<vmem>>, %arg5: memref<1x256xf32, #tpu.memory_space<vmem>>, %arg6: memref<256x256xbf16, #tpu.memory_space<vmem>>, %arg7: memref<1x256xf32, #tpu.memory_space<vmem>>, %arg8: memref<1x256xf32, #tpu.memory_space<vmem>>, %arg9: memref<1x1xf32, #tpu.memory_space<vmem>>, %arg10: memref<128x1xf32, #tpu.memory_space<vmem>>) attributes {dimension_semantics = [#tpu.dimension_semantics<parallel>], iteration_bounds = array<i64: 1>, scalar_prefetch = 0 : i64, scratch_operands = 0 : i64, tpu.core_type = #tpu.core_type<tc>, window_params = [{transform_indices = @transform_0, window_bounds = array<i64: 128, 40>}, {pipeline_mode = #tpu.pipeline_mode<synchronous>, transform_indices = @transform_1, window_bounds = array<i64: 40, 256>}, {pipeline_mode = #tpu.pipeline_mode<synchronous>, transform_indices = @transform_2, window_bounds = array<i64: 1, 256>}, {pipeline_mode = #tpu.pipeline_mode<synchronous>, transform_indices = @transform_3, window_bounds = array<i64: 256, 256>}, {pipeline_mode = #tpu.pipeline_mode<synchronous>, transform_indices = @transform_4, window_bounds = array<i64: 1, 256>}, {pipeline_mode = #tpu.pipeline_mode<synchronous>, transform_indices = @transform_5, window_bounds = array<i64: 256, 256>}, {pipeline_mode = #tpu.pipeline_mode<synchronous>, transform_indices = @transform_6, window_bounds = array<i64: 1, 256>}, {pipeline_mode = #tpu.pipeline_mode<synchronous>, transform_indices = @transform_7, window_bounds = array<i64: 1, 256>}, {pipeline_mode = #tpu.pipeline_mode<synchronous>, transform_indices = @transform_8, window_bounds = array<i64: 1, 1>}, {transform_indices = @transform_9, window_bounds = array<i64: 128, 1>}]} {
    %c0 = arith.constant 0 : index
    %c0_0 = arith.constant 0 : index
    %0 = vector.load %arg1[%c0, %c0_0] : memref<128x40xbf16, #tpu.memory_space<vmem>>, vector<128x40xbf16>
    %c0_1 = arith.constant 0 : index
    %c0_2 = arith.constant 0 : index
    %1 = vector.load %arg2[%c0_1, %c0_2] : memref<40x256xbf16, #tpu.memory_space<vmem>>, vector<40x256xbf16>
    %cst = arith.constant dense<0.000000e+00> : vector<128x256xf32>
    %2 = tpu.matmul %0, %1, %cst {dimension_numbers = #tpu.dot_dimension_numbers<[1], [0], [0], [1], [0, 0, 1, 1], [], []>} : vector<128x40xbf16>, vector<40x256xbf16>, vector<128x256xf32> -> vector<128x256xf32>
    %c0_3 = arith.constant 0 : index
    %c0_4 = arith.constant 0 : index
    %3 = vector.load %arg3[%c0_3, %c0_4] : memref<1x256xf32, #tpu.memory_space<vmem>>, vector<1x256xf32>
    %4 = vector.broadcast %3 : vector<1x256xf32> to vector<128x256xf32>
    %5 = arith.addf %2, %4 : vector<128x256xf32>
    %cst_5 = arith.constant 0.000000e+00 : f32
    %6 = vector.broadcast %cst_5 : f32 to vector<128x256xf32>
    %7 = arith.maximumf %5, %6 : vector<128x256xf32>
    %8 = arith.truncf %7 : vector<128x256xf32> to vector<128x256xbf16>
    %c0_6 = arith.constant 0 : index
    %c0_7 = arith.constant 0 : index
    %9 = vector.load %arg4[%c0_6, %c0_7] : memref<256x256xbf16, #tpu.memory_space<vmem>>, vector<256x256xbf16>
    %cst_8 = arith.constant dense<0.000000e+00> : vector<128x256xf32>
    %10 = tpu.matmul %8, %9, %cst_8 {dimension_numbers = #tpu.dot_dimension_numbers<[1], [0], [0], [1], [0, 0, 1, 1], [], []>} : vector<128x256xbf16>, vector<256x256xbf16>, vector<128x256xf32> -> vector<128x256xf32>
    %c0_9 = arith.constant 0 : index
    %c0_10 = arith.constant 0 : index
    %11 = vector.load %arg5[%c0_9, %c0_10] : memref<1x256xf32, #tpu.memory_space<vmem>>, vector<1x256xf32>
    %12 = vector.broadcast %11 : vector<1x256xf32> to vector<128x256xf32>
    %13 = arith.addf %10, %12 : vector<128x256xf32>
    %cst_11 = arith.constant 0.000000e+00 : f32
    %14 = vector.broadcast %cst_11 : f32 to vector<128x256xf32>
    %15 = arith.maximumf %13, %14 : vector<128x256xf32>
    %16 = arith.truncf %15 : vector<128x256xf32> to vector<128x256xbf16>
    %c0_12 = arith.constant 0 : index
    %c0_13 = arith.constant 0 : index
    %17 = vector.load %arg6[%c0_12, %c0_13] : memref<256x256xbf16, #tpu.memory_space<vmem>>, vector<256x256xbf16>
    %cst_14 = arith.constant dense<0.000000e+00> : vector<128x256xf32>
    %18 = tpu.matmul %16, %17, %cst_14 {dimension_numbers = #tpu.dot_dimension_numbers<[1], [0], [0], [1], [0, 0, 1, 1], [], []>} : vector<128x256xbf16>, vector<256x256xbf16>, vector<128x256xf32> -> vector<128x256xf32>
    %c0_15 = arith.constant 0 : index
    %c0_16 = arith.constant 0 : index
    %19 = vector.load %arg7[%c0_15, %c0_16] : memref<1x256xf32, #tpu.memory_space<vmem>>, vector<1x256xf32>
    %20 = vector.broadcast %19 : vector<1x256xf32> to vector<128x256xf32>
    %21 = arith.addf %18, %20 : vector<128x256xf32>
    %cst_17 = arith.constant 0.000000e+00 : f32
    %22 = vector.broadcast %cst_17 : f32 to vector<128x256xf32>
    %23 = arith.maximumf %21, %22 : vector<128x256xf32>
    %c0_18 = arith.constant 0 : index
    %c0_19 = arith.constant 0 : index
    %24 = vector.load %arg8[%c0_18, %c0_19] : memref<1x256xf32, #tpu.memory_space<vmem>>, vector<1x256xf32>
    %25 = vector.broadcast %24 : vector<1x256xf32> to vector<128x256xf32>
    %26 = arith.mulf %23, %25 : vector<128x256xf32>
    %cst_20 = arith.constant dense<0.000000e+00> : vector<128xf32>
    %27 = vector.multi_reduction <add>, %26, %cst_20 [1] : vector<128x256xf32> to vector<128xf32>
    %28 = vector.shape_cast %27 : vector<128xf32> to vector<128x1xf32>
    %c0_21 = arith.constant 0 : index
    %c0_22 = arith.constant 0 : index
    %29 = vector.load %arg9[%c0_21, %c0_22] : memref<1x1xf32, #tpu.memory_space<vmem>>, vector<1x1xf32>
    %30 = vector.broadcast %29 : vector<1x1xf32> to vector<128x1xf32>
    %31 = arith.addf %28, %30 : vector<128x1xf32>
    %c0_23 = arith.constant 0 : index
    %c0_24 = arith.constant 0 : index
    %32 = vector.load %arg10[%c0_23, %c0_24] : memref<128x1xf32, #tpu.memory_space<vmem>>, vector<128x1xf32>
    tpu.vector_store %arg10[%c0_23, %c0_24], %31 {strides = array<i32>} : memref<128x1xf32, #tpu.memory_space<vmem>>, vector<128x1xf32>,
    return
  }
  func.func @transform_0(%arg0: i32) -> (i32, i32) {
    %c0_i32 = arith.constant 0 : i32
    %c0_i32_0 = arith.constant 0 : i32
    return %arg0, %c0_i32 : i32, i32
  }
  func.func @transform_1(%arg0: i32) -> (i32, i32) {
    %c0_i32 = arith.constant 0 : i32
    %c0_i32_0 = arith.constant 0 : i32
    %c0_i32_1 = arith.constant 0 : i32
    return %c0_i32, %c0_i32_0 : i32, i32
  }
  func.func @transform_2(%arg0: i32) -> (i32, i32) {
    %c0_i32 = arith.constant 0 : i32
    %c0_i32_0 = arith.constant 0 : i32
    %c0_i32_1 = arith.constant 0 : i32
    return %c0_i32, %c0_i32_0 : i32, i32
  }
  func.func @transform_3(%arg0: i32) -> (i32, i32) {
    %c0_i32 = arith.constant 0 : i32
    %c0_i32_0 = arith.constant 0 : i32
    %c0_i32_1 = arith.constant 0 : i32
    return %c0_i32, %c0_i32_0 : i32, i32
  }
  func.func @transform_4(%arg0: i32) -> (i32, i32) {
    %c0_i32 = arith.constant 0 : i32
    %c0_i32_0 = arith.constant 0 : i32
    %c0_i32_1 = arith.constant 0 : i32
    return %c0_i32, %c0_i32_0 : i32, i32
  }
  func.func @transform_5(%arg0: i32) -> (i32, i32) {
    %c0_i32 = arith.constant 0 : i32
    %c0_i32_0 = arith.constant 0 : i32
    %c0_i32_1 = arith.constant 0 : i32
    return %c0_i32, %c0_i32_0 : i32, i32
  }
  func.func @transform_6(%arg0: i32) -> (i32, i32) {
    %c0_i32 = arith.constant 0 : i32
    %c0_i32_0 = arith.constant 0 : i32
    %c0_i32_1 = arith.constant 0 : i32
    return %c0_i32, %c0_i32_0 : i32, i32
  }
  func.func @transform_7(%arg0: i32) -> (i32, i32) {
    %c0_i32 = arith.constant 0 : i32
    %c0_i32_0 = arith.constant 0 : i32
    %c0_i32_1 = arith.constant 0 : i32
    return %c0_i32, %c0_i32_0 : i32, i32
  }
  func.func @transform_8(%arg0: i32) -> (i32, i32) {
    %c0_i32 = arith.constant 0 : i32
    %c0_i32_0 = arith.constant 0 : i32
    %c0_i32_1 = arith.constant 0 : i32
    return %c0_i32, %c0_i32_0 : i32, i32
  }
  func.func @transform_9(%arg0: i32) -> (i32, i32) {
    %c0_i32 = arith.constant 0 : i32
    %c0_i32_0 = arith.constant 0 : i32
    return %arg0, %c0_i32 : i32, i32
  }
}

</mosaic_0001>

<llo_original>
// kernel: tpu_custom_call.1
$region0: #{tpu_custom_call.1}
  #allocation0 [shape = 'u32[]', space=smem, size = 0x4, offset = 0x4, fixed_abs, tag = 'smem constant byte address 0x4 - core index']
  #allocation1 [shape = 'u32[144,128]{1,0:T(1,128)}', space=vmem, size = 0x12000, scoped, tag = 'internal scratch']
  #allocation2 [shape = 'f32[1,1]{1,0:T(1,128)S(1)}', space=vmem, size = 0x200, scoped, tag = 'scoped memory for tpu_custom_call.1']
  %s0 = inlined_call_operand.vmem [shape: bf16[128,40], index: 0, kind: input, shape index: {}]
  %s1 = inlined_call_operand.vmem [shape: bf16[40,256], index: 1, kind: input, shape index: {}]
  %s2 = inlined_call_operand.vmem [shape: f32[1,256], index: 2, kind: input, shape index: {}]
  %s3 = inlined_call_operand.hbm [shape: bf16[256,256], index: 3, kind: input, shape index: {}]
  %s4 = inlined_call_operand.vmem [shape: f32[1,256], index: 4, kind: input, shape index: {}]
  %s5 = inlined_call_operand.hbm [shape: bf16[256,256], index: 5, kind: input, shape index: {}]
  %s6 = inlined_call_operand.vmem [shape: f32[1,256], index: 6, kind: input, shape index: {}]
  %s7 = inlined_call_operand.vmem [shape: f32[1,256], index: 7, kind: input, shape index: {}]
  %s8 = inlined_call_operand.<no memory space> [shape: f32[1,1], index: 8, kind: input, shape index: {}]
  %s9 = inlined_call_operand.vmem [shape: f32[128,1], index: 9, kind: output, shape index: {}]
  %s10 = sld [smem:[#allocation0]]
  $region54: #{tpu_custom_call.1} parent=0
    _
  %s12 = ssub.s32 1, %s10
  %s13 = scalar_select 0, %s12, %s10
  %v14 = vstv %s8
  %15 = vst [vmem:[#allocation2] sm:$0x1] %v14
  $region1: #{tpu_custom_call.1} parent=0
    #allocation3 [shape = 'u8[131072]{0}', space=vmem, size = 0x20000, scoped, tag = 'input window, operand 3, single buffered']
    #allocation4 [shape = 's32[1]{0}', space=sflag, size = 0x4, scoped, tag = 'scoped memory for tpu_custom_call.1']
    #allocation5 [shape = 'u8[131072]{0}', space=vmem, size = 0x20000, scoped, tag = 'input window, operand 5, single buffered']
    #allocation6 [shape = 's32[1]{0}', space=sflag, size = 0x4, scoped, tag = 'scoped memory for tpu_custom_call.1']
    %16 = vsyncpa [#allocation4], 0
    %17 = vsyncpa [#allocation6], 0
    // Predicated region
    $region2: #{tpu_custom_call.1} parent=1 // pred_check
      _
    $region3: #{tpu_custom_call.1} parent=1 // pred_check_branch
      %19 = sbr.rel (0) target = $region5
    $region4: #{tpu_custom_call.1} parent=1 // pred_region
      _
    $region5: #{tpu_custom_call.1} parent=1 // pred_fallthru
      _
    // Predicated region
    $region6: #{tpu_custom_call.1} parent=1 // pred_check
      _
    $region7: #{tpu_custom_call.1} parent=1 // pred_check_branch
      %21 = sbr.rel (0) target = $region9
    $region8: #{tpu_custom_call.1} parent=1 // pred_region
      _
    $region9: #{tpu_custom_call.1} parent=1 // pred_fallthru
      _
    // Predicated region
    $region10: #{tpu_custom_call.1} parent=1 // pred_check
      _
    $region11: #{tpu_custom_call.1} parent=1 // pred_check_branch
      %23 = sbr.rel (0) target = $region13
    $region12: #{tpu_custom_call.1} parent=1 // pred_region
      _
    $region13: #{tpu_custom_call.1} parent=1 // pred_fallthru
      _
    // Predicated region
    $region14: #{tpu_custom_call.1} parent=1 // pred_check
      _
    $region15: #{tpu_custom_call.1} parent=1 // pred_check_branch
      %25 = sbr.rel (0) target = $region17
    $region16: #{tpu_custom_call.1} parent=1 // pred_region
      %s27 = ssub.s32 4096, 4096
      %28 = vsyncadd [#allocation4], %s27
      %s29 = sshll.u32 [#allocation3], 4
      %s30 = int_to_ptr.vmem [resolvable:$true] %s29
      %35 = dma.hbm_to_vmem [thread:$0]  %s3, 4096, %s30, [#allocation4], 128, 128, 8
    $region17: #{tpu_custom_call.1} parent=1 // pred_fallthru
      _
    // Predicated region
    $region18: #{tpu_custom_call.1} parent=1 // pred_check
      _
    $region19: #{tpu_custom_call.1} parent=1 // pred_check_branch
      %37 = sbr.rel (0) target = $region21
    $region20: #{tpu_custom_call.1} parent=1 // pred_region
      _
    $region21: #{tpu_custom_call.1} parent=1 // pred_fallthru
      _
    // Predicated region
    $region22: #{tpu_custom_call.1} parent=1 // pred_check
      _
    $region23: #{tpu_custom_call.1} parent=1 // pred_check_branch
      %39 = sbr.rel (0) target = $region25
    $region24: #{tpu_custom_call.1} parent=1 // pred_region
      %s41 = ssub.s32 4096, 4096
      %42 = vsyncadd [#allocation6], %s41
      %s43 = sshll.u32 [#allocation5], 4
      %s44 = int_to_ptr.vmem [resolvable:$true] %s43
      %49 = dma.hbm_to_vmem [thread:$0]  %s5, 4096, %s44, [#allocation6], 128, 128, 8
    $region25: #{tpu_custom_call.1} parent=1 // pred_fallthru
      _
    // Predicated region
    $region26: #{tpu_custom_call.1} parent=1 // pred_check
      _
    $region27: #{tpu_custom_call.1} parent=1 // pred_check_branch
      %51 = sbr.rel (0) target = $region29
    $region28: #{tpu_custom_call.1} parent=1 // pred_region
      _
    $region29: #{tpu_custom_call.1} parent=1 // pred_fallthru
      _
    // Predicated region
    $region30: #{tpu_custom_call.1} parent=1 // pred_check
      _
    $region31: #{tpu_custom_call.1} parent=1 // pred_check_branch
      %53 = sbr.rel (0) target = $region33
    $region32: #{tpu_custom_call.1} parent=1 // pred_region
      _
    $region33: #{tpu_custom_call.1} parent=1 // pred_fallthru
      _
    // Predicated region
    $region34: #{tpu_custom_call.1} parent=1 // pred_check
      _
    $region35: #{tpu_custom_call.1} parent=1 // pred_check_branch
      %55 = sbr.rel (0) target = $region37
    $region36: #{tpu_custom_call.1} parent=1 // pred_region
      _
    $region37: #{tpu_custom_call.1} parent=1 // pred_fallthru
      _
    // Predicated region
    $region38: #{tpu_custom_call.1} parent=1 // pred_check
      _
    $region39: #{tpu_custom_call.1} parent=1 // pred_check_branch
      %57 = sbr.rel (0) target = $region41
    $region40: #{tpu_custom_call.1} parent=1 // pred_region
      %58 = dma.done [#allocation4], 4096
    $region41: #{tpu_custom_call.1} parent=1 // pred_fallthru
      _
    // Predicated region
    $region42: #{tpu_custom_call.1} parent=1 // pred_check
      _
    $region43: #{tpu_custom_call.1} parent=1 // pred_check_branch
      %60 = sbr.rel (0) target = $region45
    $region44: #{tpu_custom_call.1} parent=1 // pred_region
      %61 = dma.done [#allocation6], 4096
    $region45: #{tpu_custom_call.1} parent=1 // pred_fallthru
      _
    %v63 = vld [vmem:[%s0] sm:$0xf]
    %v64 = vld [vmem:[%s0 + $0x4] sm:$0xf]
    %v65 = vld [vmem:[%s0 + $0x8] sm:$0xf]
    %v66 = vld [vmem:[%s0 + $0xc] sm:$0xf]
    %v67 = vld [vmem:[%s0 + $0x10] sm:$0xf]
    %v68 = vld [vmem:[%s0 + $0x14] sm:$0xf]
    %v69 = vld [vmem:[%s0 + $0x18] sm:$0xf]
    %v70 = vld [vmem:[%s0 + $0x1c] sm:$0xf]
    %v71 = vld [vmem:[%s0 + $0x20] sm:$0xf]
    %v72 = vld [vmem:[%s0 + $0x24] sm:$0xf]
    %v73 = vld [vmem:[%s0 + $0x28] sm:$0xf]
    %v74 = vld [vmem:[%s0 + $0x2c] sm:$0xf]
    %v75 = vld [vmem:[%s0 + $0x30] sm:$0xf]
    %v76 = vld [vmem:[%s0 + $0x34] sm:$0xf]
    %v77 = vld [vmem:[%s0 + $0x38] sm:$0xf]
    %v78 = vld [vmem:[%s0 + $0x3c] sm:$0xf]
    %v79 = vld [vmem:[%s1] sm:$0xff]
    %v80 = vld [vmem:[%s1 + $0x8] sm:$0xff]
    %v81 = vld [vmem:[%s1 + $0x10] sm:$0xff]
    %v82 = vld [vmem:[%s1 + $0x18] sm:$0xff]
    %v83 = vld [vmem:[%s1 + $0x20] sm:$0xff]
    %v84 = vld [vmem:[%s2] sm:$0x3]
    %v86 = vlaneseq
    %v87 = vshrl.u32 %v86, 7
    %v88 = vsub.s32 0, %v87
    %v89 = vrot.slane %v84, %v88
    %v90 = vlaneseq
    %v91 = vshrl.u32 %v90, 7
    %v92 = vsub.s32 1, %v91
    %v93 = vrot.slane %v84, %v92
    %v112 = vunpack.c.l.b16 %v63
    %v113 = vunpack.c.l.b16 %v64
    %v114 = vunpack.c.l.b16 %v65
    %v115 = vunpack.c.l.b16 %v66
    %v116 = vunpack.c.l.b16 %v67
    %v117 = vunpack.c.l.b16 %v68
    %v118 = vunpack.c.l.b16 %v69
    %v119 = vunpack.c.l.b16 %v70
    %v120 = vunpack.c.l.b16 %v71
    %v121 = vunpack.c.l.b16 %v72
    %v122 = vunpack.c.l.b16 %v73
    %v123 = vunpack.c.l.b16 %v74
    %v124 = vunpack.c.l.b16 %v75
    %v125 = vunpack.c.l.b16 %v76
    %v126 = vunpack.c.l.b16 %v77
    %v127 = vunpack.c.l.b16 %v78
    %v128 = vpack.c.b16 %v113, %v112
    %v129 = vpack.c.b16 %v115, %v114
    %v130 = vpack.c.b16 %v117, %v116
    %v131 = vpack.c.b16 %v119, %v118
    %v132 = vpack.c.b16 %v121, %v120
    %v133 = vpack.c.b16 %v123, %v122
    %v134 = vpack.c.b16 %v125, %v124
    %v135 = vpack.c.b16 %v127, %v126
    %v141 = vunpack.c.l.b16 %v79
    %v142 = vunpack.c.h.b16 %v79
    %v143 = vunpack.c.l.b16 %v80
    %v144 = vunpack.c.h.b16 %v80
    %v145 = vunpack.c.l.b16 %v81
    %v146 = vunpack.c.h.b16 %v81
    %v147 = vunpack.c.l.b16 %v82
    %v148 = vunpack.c.h.b16 %v82
    %v149 = vunpack.c.l.b16 %v83
    %v150 = vunpack.c.h.b16 %v83
    %v151 = vpack.c.b16 %v143, %v141
    %v152 = vpack.c.b16 %v144, %v142
    %v153 = vpack.c.b16 %v147, %v145
    %v154 = vpack.c.b16 %v148, %v146
    %v155 = vpack.c.b16 %v149, %v149
    %v156 = vpack.c.b16 %v150, %v150
    %vm161 = vcmask 326656
    %v163 = vsel %vm161, %v128, 0
    %v166 = vsel %vm161, %v129, 0
    %v169 = vsel %vm161, %v130, 0
    %v172 = vsel %vm161, %v131, 0
    %v175 = vsel %vm161, %v132, 0
    %v178 = vsel %vm161, %v133, 0
    %v181 = vsel %vm161, %v134, 0
    %v184 = vsel %vm161, %v135, 0
    %vm186 = vcmask 1043456
    %v188 = vsel %vm186, %v155, 0
    %v191 = vsel %vm186, %v156, 0
    %193 = vmatprep.subr.bf16.mxu0 0
    %194 = vmatpush1.bf16.msra.mxu0 0
    %195 = vmatprep.subr.bf16.mxu0 0
    %196 = vmatpush1.bf16.msra.mxu0 0
    %197 = vmatprep.subr.bf16.mxu0 0
    %198 = vmatpush1.bf16.msra.mxu0 0
    %199 = vmatprep.subr.bf16.mxu0 0
    %200 = vmatpush1.bf16.msra.mxu0 0
    %201 = vmatprep.subr.bf16.mxu0 0
    %202 = vmatpush1.bf16.msra.mxu0 0
    %203 = vmatprep.subr.bf16.mxu0 %v191
    %204 = vmatpush1.bf16.msra.mxu0 %v188
    %205 = vmatprep.subr.bf16.mxu0 %v154
    %206 = vmatpush1.bf16.msra.mxu0 %v153
    %207 = vmatprep.subr.bf16.mxu0 %v152
    %208 = vmatpush1.bf16.msra.mxu0 %v151
    %209 = vmatprep.subr.bf16.mxu0 0
    %210 = vmatpush2.bf16.msra.mxu0 0
    %211 = vmatprep.subr.bf16.mxu0 0
    %212 = vmatpush2.bf16.msra.mxu0 0
    %213 = vmatprep.subr.bf16.mxu0 0
    %214 = vmatpush2.bf16.msra.mxu0 0
    %215 = vmatprep.subr.bf16.mxu0 0
    %216 = vmatpush2.bf16.msra.mxu0 0
    %217 = vmatprep.subr.bf16.mxu0 0
    %218 = vmatpush2.bf16.msra.mxu0 0
    %219 = vmatprep.subr.bf16.mxu0 0
    %220 = vmatpush2.bf16.msra.mxu0 0
    %221 = vmatprep.subr.bf16.mxu0 0
    %222 = vmatpush2.bf16.msra.mxu0 0
    %223 = vmatprep.subr.bf16.mxu0 0
    %224 = vmatpush2.bf16.msra.mxu0 0
    %225 = vmatprep.mubr.bf16.mxu0 0
    %226 = vmatmul.mubr.bf16.gmra.mxu0 %v163
    %v227 = vpop.f32.mrf.mxu0
    %v228 = vadd.f32 %v89, %v227
    %v229 = vpop.f32.mrf.mxu0
    %v230 = vadd.f32 %v93, %v229
    %v231 = vpop.f32.mrf.mxu0
    %v232 = vadd.f32 %v89, %v231
    %v233 = vpop.f32.mrf.mxu0
    %v234 = vadd.f32 %v93, %v233
    %235 = vmatprep.mubr.bf16.mxu0 0
    %236 = vmatmul.mubr.bf16.gmra.mxu0 %v166
    %v237 = vpop.f32.mrf.mxu0
    %v238 = vadd.f32 %v89, %v237
    %v239 = vpop.f32.mrf.mxu0
    %v240 = vadd.f32 %v93, %v239
    %v241 = vpop.f32.mrf.mxu0
    %v242 = vadd.f32 %v89, %v241
    %v243 = vpop.f32.mrf.mxu0
    %v244 = vadd.f32 %v93, %v243
    %245 = vmatprep.mubr.bf16.mxu0 0
    %246 = vmatmul.mubr.bf16.gmra.mxu0 %v169
    %v247 = vpop.f32.mrf.mxu0
    %v248 = vadd.f32 %v89, %v247
    %v249 = vpop.f32.mrf.mxu0
    %v250 = vadd.f32 %v93, %v249
    %v251 = vpop.f32.mrf.mxu0
    %v252 = vadd.f32 %v89, %v251
    %v253 = vpop.f32.mrf.mxu0
    %v254 = vadd.f32 %v93, %v253
    %255 = vmatprep.mubr.bf16.mxu0 0
    %256 = vmatmul.mubr.bf16.gmra.mxu0 %v172
    %v257 = vpop.f32.mrf.mxu0
    %v258 = vadd.f32 %v89, %v257
    %v259 = vpop.f32.mrf.mxu0
    %v260 = vadd.f32 %v93, %v259
    %v261 = vpop.f32.mrf.mxu0
    %v262 = vadd.f32 %v89, %v261
    %v263 = vpop.f32.mrf.mxu0
    %v264 = vadd.f32 %v93, %v263
    %265 = vmatprep.mubr.bf16.mxu0 0
    %266 = vmatmul.mubr.bf16.gmra.mxu0 %v175
    %v267 = vpop.f32.mrf.mxu0
    %v268 = vadd.f32 %v89, %v267
    %v269 = vpop.f32.mrf.mxu0
    %v270 = vadd.f32 %v93, %v269
    %v271 = vpop.f32.mrf.mxu0
    %v272 = vadd.f32 %v89, %v271
    %v273 = vpop.f32.mrf.mxu0
    %v274 = vadd.f32 %v93, %v273
    %275 = vmatprep.mubr.bf16.mxu0 0
    %276 = vmatmul.mubr.bf16.gmra.mxu0 %v178
    %v277 = vpop.f32.mrf.mxu0
    %v278 = vadd.f32 %v89, %v277
    %v279 = vpop.f32.mrf.mxu0
    %v280 = vadd.f32 %v93, %v279
    %v281 = vpop.f32.mrf.mxu0
    %v282 = vadd.f32 %v89, %v281
    %v283 = vpop.f32.mrf.mxu0
    %v284 = vadd.f32 %v93, %v283
    %285 = vmatprep.mubr.bf16.mxu0 0
    %286 = vmatmul.mubr.bf16.gmra.mxu0 %v181
    %v287 = vpop.f32.mrf.mxu0
    %v288 = vadd.f32 %v89, %v287
    %v289 = vpop.f32.mrf.mxu0
    %v290 = vadd.f32 %v93, %v289
    %v291 = vpop.f32.mrf.mxu0
    %v292 = vadd.f32 %v89, %v291
    %v293 = vpop.f32.mrf.mxu0
    %v294 = vadd.f32 %v93, %v293
    %295 = vmatprep.mubr.bf16.mxu0 0
    %296 = vmatmul.mubr.bf16.gmra.mxu0 %v184
    %v297 = vpop.f32.mrf.mxu0
    %v298 = vadd.f32 %v89, %v297
    %v299 = vpop.f32.mrf.mxu0
    %v300 = vadd.f32 %v93, %v299
    %v301 = vpop.f32.mrf.mxu0
    %v302 = vadd.f32 %v89, %v301
    %v303 = vpop.f32.mrf.mxu0
    %v304 = vadd.f32 %v93, %v303
    %305 = vdwg.mxu0
    %v306 = vmax.f32 %v228, 0.0
    %v307 = vmax.f32 %v230, 0.0
    %v308 = vmax.f32 %v232, 0.0
    %v309 = vmax.f32 %v234, 0.0
    %v310 = vmax.f32 %v238, 0.0
    %v311 = vmax.f32 %v240, 0.0
    %v312 = vmax.f32 %v242, 0.0
    %v313 = vmax.f32 %v244, 0.0
    %v314 = vmax.f32 %v248, 0.0
    %v315 = vmax.f32 %v250, 0.0
    %v316 = vmax.f32 %v252, 0.0
    %v317 = vmax.f32 %v254, 0.0
    %v318 = vmax.f32 %v258, 0.0
    %v319 = vmax.f32 %v260, 0.0
    %v320 = vmax.f32 %v262, 0.0
    %v321 = vmax.f32 %v264, 0.0
    %v322 = vmax.f32 %v268, 0.0
    %v323 = vmax.f32 %v270, 0.0
    %v324 = vmax.f32 %v272, 0.0
    %v325 = vmax.f32 %v274, 0.0
    %v326 = vmax.f32 %v278, 0.0
    %v327 = vmax.f32 %v280, 0.0
    %v328 = vmax.f32 %v282, 0.0
    %v329 = vmax.f32 %v284, 0.0
    %v330 = vmax.f32 %v288, 0.0
    %v331 = vmax.f32 %v290, 0.0
    %v332 = vmax.f32 %v292, 0.0
    %v333 = vmax.f32 %v294, 0.0
    %v334 = vmax.f32 %v298, 0.0
    %v335 = vmax.f32 %v300, 0.0
    %v336 = vmax.f32 %v302, 0.0
    %v337 = vmax.f32 %v304, 0.0
    %v338 = vpack.c.bf16 %v308, %v306
    %v339 = vpack.c.bf16 %v309, %v307
    %v340 = vpack.c.bf16 %v312, %v310
    %v341 = vpack.c.bf16 %v313, %v311
    %v342 = vpack.c.bf16 %v316, %v314
    %v343 = vpack.c.bf16 %v317, %v315
    %v344 = vpack.c.bf16 %v320, %v318
    %v345 = vpack.c.bf16 %v321, %v319
    %v346 = vpack.c.bf16 %v324, %v322
    %v347 = vpack.c.bf16 %v325, %v323
    %v348 = vpack.c.bf16 %v328, %v326
    %v349 = vpack.c.bf16 %v329, %v327
    %v350 = vpack.c.bf16 %v332, %v330
    %v351 = vpack.c.bf16 %v333, %v331
    %v352 = vpack.c.bf16 %v336, %v334
    %v353 = vpack.c.bf16 %v337, %v335
    %v354 = vld [vmem:[#allocation3] sm:$0xff]
    %v355 = vld [vmem:[#allocation3 + $0x8] sm:$0xff]
    %v356 = vld [vmem:[#allocation3 + $0x10] sm:$0xff]
    %v357 = vld [vmem:[#allocation3 + $0x18] sm:$0xff]
    %v358 = vld [vmem:[#allocation3 + $0x20] sm:$0xff]
    %v359 = vld [vmem:[#allocation3 + $0x28] sm:$0xff]
    %v360 = vld [vmem:[#allocation3 + $0x30] sm:$0xff]
    %v361 = vld [vmem:[#allocation3 + $0x38] sm:$0xff]
    %v362 = vld [vmem:[#allocation3 + $0x40] sm:$0xff]
    %v363 = vld [vmem:[#allocation3 + $0x48] sm:$0xff]
    %v364 = vld [vmem:[#allocation3 + $0x50] sm:$0xff]
    %v365 = vld [vmem:[#allocation3 + $0x58] sm:$0xff]
    %v366 = vld [vmem:[#allocation3 + $0x60] sm:$0xff]
    %v367 = vld [vmem:[#allocation3 + $0x68] sm:$0xff]
    %v368 = vld [vmem:[#allocation3 + $0x70] sm:$0xff]
    %v369 = vld [vmem:[#allocation3 + $0x78] sm:$0xff]
    %v370 = vld [vmem:[#allocation3 + $0x80] sm:$0xff]
    %v371 = vld [vmem:[#allocation3 + $0x88] sm:$0xff]
    %v372 = vld [vmem:[#allocation3 + $0x90] sm:$0xff]
    %v373 = vld [vmem:[#allocation3 + $0x98] sm:$0xff]
    %v374 = vld [vmem:[#allocation3 + $0xa0] sm:$0xff]
    %v375 = vld [vmem:[#allocation3 + $0xa8] sm:$0xff]
    %v376 = vld [vmem:[#allocation3 + $0xb0] sm:$0xff]
    %v377 = vld [vmem:[#allocation3 + $0xb8] sm:$0xff]
    %v378 = vld [vmem:[#allocation3 + $0xc0] sm:$0xff]
    %v379 = vld [vmem:[#allocation3 + $0xc8] sm:$0xff]
    %v380 = vld [vmem:[#allocation3 + $0xd0] sm:$0xff]
    %v381 = vld [vmem:[#allocation3 + $0xd8] sm:$0xff]
    %v382 = vld [vmem:[#allocation3 + $0xe0] sm:$0xff]
    %v383 = vld [vmem:[#allocation3 + $0xe8] sm:$0xff]
    %v384 = vld [vmem:[#allocation3 + $0xf0] sm:$0xff]
    %v385 = vld [vmem:[#allocation3 + $0xf8] sm:$0xff]
    %v386 = vld [vmem:[%s4] sm:$0x3]
    %v388 = vlaneseq
    %v389 = vshrl.u32 %v388, 7
    %v390 = vsub.s32 0, %v389
    %v391 = vrot.slane %v386, %v390
    %v392 = vlaneseq
    %v393 = vshrl.u32 %v392, 7
    %v394 = vsub.s32 1, %v393
    %v395 = vrot.slane %v386, %v394
    %v430 = vunpack.c.l.b16 %v354
    %v431 = vunpack.c.h.b16 %v354
    %v432 = vunpack.c.l.b16 %v355
    %v433 = vunpack.c.h.b16 %v355
    %v434 = vunpack.c.l.b16 %v356
    %v435 = vunpack.c.h.b16 %v356
    %v436 = vunpack.c.l.b16 %v357
    %v437 = vunpack.c.h.b16 %v357
    %v438 = vunpack.c.l.b16 %v358
    %v439 = vunpack.c.h.b16 %v358
    %v440 = vunpack.c.l.b16 %v359
    %v441 = vunpack.c.h.b16 %v359
    %v442 = vunpack.c.l.b16 %v360
    %v443 = vunpack.c.h.b16 %v360
    %v444 = vunpack.c.l.b16 %v361
    %v445 = vunpack.c.h.b16 %v361
    %v446 = vunpack.c.l.b16 %v362
    %v447 = vunpack.c.h.b16 %v362
    %v448 = vunpack.c.l.b16 %v363
    %v449 = vunpack.c.h.b16 %v363
    %v450 = vunpack.c.l.b16 %v364
    %v451 = vunpack.c.h.b16 %v364
    %v452 = vunpack.c.l.b16 %v365
    %v453 = vunpack.c.h.b16 %v365
    %v454 = vunpack.c.l.b16 %v366
    %v455 = vunpack.c.h.b16 %v366
    %v456 = vunpack.c.l.b16 %v367
    %v457 = vunpack.c.h.b16 %v367
    %v458 = vunpack.c.l.b16 %v368
    %v459 = vunpack.c.h.b16 %v368
    %v460 = vunpack.c.l.b16 %v369
    %v461 = vunpack.c.h.b16 %v369
    %v462 = vunpack.c.l.b16 %v370
    %v463 = vunpack.c.h.b16 %v370
    %v464 = vunpack.c.l.b16 %v371
    %v465 = vunpack.c.h.b16 %v371
    %v466 = vunpack.c.l.b16 %v372
    %v467 = vunpack.c.h.b16 %v372
    %v468 = vunpack.c.l.b16 %v373
    %v469 = vunpack.c.h.b16 %v373
    %v470 = vunpack.c.l.b16 %v374
    %v471 = vunpack.c.h.b16 %v374
    %v472 = vunpack.c.l.b16 %v375
    %v473 = vunpack.c.h.b16 %v375
    %v474 = vunpack.c.l.b16 %v376
    %v475 = vunpack.c.h.b16 %v376
    %v476 = vunpack.c.l.b16 %v377
    %v477 = vunpack.c.h.b16 %v377
    %v478 = vunpack.c.l.b16 %v378
    %v479 = vunpack.c.h.b16 %v378
    %v480 = vunpack.c.l.b16 %v379
    %v481 = vunpack.c.h.b16 %v379
    %v482 = vunpack.c.l.b16 %v380
    %v483 = vunpack.c.h.b16 %v380
    %v484 = vunpack.c.l.b16 %v381
    %v485 = vunpack.c.h.b16 %v381
    %v486 = vunpack.c.l.b16 %v382
    %v487 = vunpack.c.h.b16 %v382
    %v488 = vunpack.c.l.b16 %v383
    %v489 = vunpack.c.h.b16 %v383
    %v490 = vunpack.c.l.b16 %v384
    %v491 = vunpack.c.h.b16 %v384
    %v492 = vunpack.c.l.b16 %v385
    %v493 = vunpack.c.h.b16 %v385
    %v494 = vpack.c.b16 %v432, %v430
    %v495 = vpack.c.b16 %v433, %v431
    %v496 = vpack.c.b16 %v436, %v434
    %v497 = vpack.c.b16 %v437, %v435
    %v498 = vpack.c.b16 %v440, %v438
    %v499 = vpack.c.b16 %v441, %v439
    %v500 = vpack.c.b16 %v444, %v442
    %v501 = vpack.c.b16 %v445, %v443
    %v502 = vpack.c.b16 %v448, %v446
    %v503 = vpack.c.b16 %v449, %v447
    %v504 = vpack.c.b16 %v452, %v450
    %v505 = vpack.c.b16 %v453, %v451
    %v506 = vpack.c.b16 %v456, %v454
    %v507 = vpack.c.b16 %v457, %v455
    %v508 = vpack.c.b16 %v460, %v458
    %v509 = vpack.c.b16 %v461, %v459
    %v510 = vpack.c.b16 %v464, %v462
    %v511 = vpack.c.b16 %v465, %v463
    %v512 = vpack.c.b16 %v468, %v466
    %v513 = vpack.c.b16 %v469, %v467
    %v514 = vpack.c.b16 %v472, %v470
    %v515 = vpack.c.b16 %v473, %v471
    %v516 = vpack.c.b16 %v476, %v474
    %v517 = vpack.c.b16 %v477, %v475
    %v518 = vpack.c.b16 %v480, %v478
    %v519 = vpack.c.b16 %v481, %v479
    %v520 = vpack.c.b16 %v484, %v482
    %v521 = vpack.c.b16 %v485, %v483
    %v522 = vpack.c.b16 %v488, %v486
    %v523 = vpack.c.b16 %v489, %v487
    %v524 = vpack.c.b16 %v492, %v490
    %v525 = vpack.c.b16 %v493, %v491
    %558 = vmatprep.subr.bf16.mxu0 %v509
    %559 = vmatpush1.bf16.msra.mxu0 %v508
    %560 = vmatprep.subr.bf16.mxu0 %v507
    %561 = vmatpush1.bf16.msra.mxu0 %v506
    %562 = vmatprep.subr.bf16.mxu0 %v505
    %563 = vmatpush1.bf16.msra.mxu0 %v504
    %564 = vmatprep.subr.bf16.mxu0 %v503
    %565 = vmatpush1.bf16.msra.mxu0 %v502
    %566 = vmatprep.subr.bf16.mxu0 %v501
    %567 = vmatpush1.bf16.msra.mxu0 %v500
    %568 = vmatprep.subr.bf16.mxu0 %v499
    %569 = vmatpush1.bf16.msra.mxu0 %v498
    %570 = vmatprep.subr.bf16.mxu0 %v497
    %571 = vmatpush1.bf16.msra.mxu0 %v496
    %572 = vmatprep.subr.bf16.mxu0 %v495
    %573 = vmatpush1.bf16.msra.mxu0 %v494
    %574 = vmatprep.subr.bf16.mxu0 %v525
    %575 = vmatpush2.bf16.msra.mxu0 %v524
    %576 = vmatprep.subr.bf16.mxu0 %v523
    %577 = vmatpush2.bf16.msra.mxu0 %v522
    %578 = vmatprep.subr.bf16.mxu0 %v521
    %579 = vmatpush2.bf16.msra.mxu0 %v520
    %580 = vmatprep.subr.bf16.mxu0 %v519
    %581 = vmatpush2.bf16.msra.mxu0 %v518
    %582 = vmatprep.subr.bf16.mxu0 %v517
    %583 = vmatpush2.bf16.msra.mxu0 %v516
    %584 = vmatprep.subr.bf16.mxu0 %v515
    %585 = vmatpush2.bf16.msra.mxu0 %v514
    %586 = vmatprep.subr.bf16.mxu0 %v513
    %587 = vmatpush2.bf16.msra.mxu0 %v512
    %588 = vmatprep.subr.bf16.mxu0 %v511
    %589 = vmatpush2.bf16.msra.mxu0 %v510
    %590 = vmatprep.mubr.bf16.mxu0 %v339
    %591 = vmatmul.mubr.bf16.gmra.mxu0 %v338
    %v592 = vpop.f32.mrf.mxu0
    %v593 = vadd.f32 %v391, %v592
    %v594 = vpop.f32.mrf.mxu0
    %v595 = vadd.f32 %v395, %v594
    %v596 = vpop.f32.mrf.mxu0
    %v597 = vadd.f32 %v391, %v596
    %v598 = vpop.f32.mrf.mxu0
    %v599 = vadd.f32 %v395, %v598
    %600 = vmatprep.mubr.bf16.mxu0 %v341
    %601 = vmatmul.mubr.bf16.gmra.mxu0 %v340
    %v602 = vpop.f32.mrf.mxu0
    %v603 = vadd.f32 %v391, %v602
    %v604 = vpop.f32.mrf.mxu0
    %v605 = vadd.f32 %v395, %v604
    %v606 = vpop.f32.mrf.mxu0
    %v607 = vadd.f32 %v391, %v606
    %v608 = vpop.f32.mrf.mxu0
    %v609 = vadd.f32 %v395, %v608
    %610 = vmatprep.mubr.bf16.mxu0 %v343
    %611 = vmatmul.mubr.bf16.gmra.mxu0 %v342
    %v612 = vpop.f32.mrf.mxu0
    %v613 = vadd.f32 %v391, %v612
    %v614 = vpop.f32.mrf.mxu0
    %v615 = vadd.f32 %v395, %v614
    %v616 = vpop.f32.mrf.mxu0
    %v617 = vadd.f32 %v391, %v616
    %v618 = vpop.f32.mrf.mxu0
    %v619 = vadd.f32 %v395, %v618
    %620 = vmatprep.mubr.bf16.mxu0 %v345
    %621 = vmatmul.mubr.bf16.gmra.mxu0 %v344
    %v622 = vpop.f32.mrf.mxu0
    %v623 = vadd.f32 %v391, %v622
    %v624 = vpop.f32.mrf.mxu0
    %v625 = vadd.f32 %v395, %v624
    %v626 = vpop.f32.mrf.mxu0
    %v627 = vadd.f32 %v391, %v626
    %v628 = vpop.f32.mrf.mxu0
    %v629 = vadd.f32 %v395, %v628
    %630 = vmatprep.mubr.bf16.mxu0 %v347
    %631 = vmatmul.mubr.bf16.gmra.mxu0 %v346
    %v632 = vpop.f32.mrf.mxu0
    %v633 = vadd.f32 %v391, %v632
    %v634 = vpop.f32.mrf.mxu0
    %v635 = vadd.f32 %v395, %v634
    %v636 = vpop.f32.mrf.mxu0
    %v637 = vadd.f32 %v391, %v636
    %v638 = vpop.f32.mrf.mxu0
    %v639 = vadd.f32 %v395, %v638
    %640 = vmatprep.mubr.bf16.mxu0 %v349
    %641 = vmatmul.mubr.bf16.gmra.mxu0 %v348
    %v642 = vpop.f32.mrf.mxu0
    %v643 = vadd.f32 %v391, %v642
    %v644 = vpop.f32.mrf.mxu0
    %v645 = vadd.f32 %v395, %v644
    %v646 = vpop.f32.mrf.mxu0
    %v647 = vadd.f32 %v391, %v646
    %v648 = vpop.f32.mrf.mxu0
    %v649 = vadd.f32 %v395, %v648
    %650 = vmatprep.mubr.bf16.mxu0 %v351
    %651 = vmatmul.mubr.bf16.gmra.mxu0 %v350
    %v652 = vpop.f32.mrf.mxu0
    %v653 = vadd.f32 %v391, %v652
    %v654 = vpop.f32.mrf.mxu0
    %v655 = vadd.f32 %v395, %v654
    %v656 = vpop.f32.mrf.mxu0
    %v657 = vadd.f32 %v391, %v656
    %v658 = vpop.f32.mrf.mxu0
    %v659 = vadd.f32 %v395, %v658
    %660 = vmatprep.mubr.bf16.mxu0 %v353
    %661 = vmatmul.mubr.bf16.gmra.mxu0 %v352
    %v662 = vpop.f32.mrf.mxu0
    %v663 = vadd.f32 %v391, %v662
    %v664 = vpop.f32.mrf.mxu0
    %v665 = vadd.f32 %v395, %v664
    %v666 = vpop.f32.mrf.mxu0
    %v667 = vadd.f32 %v391, %v666
    %v668 = vpop.f32.mrf.mxu0
    %v669 = vadd.f32 %v395, %v668
    %670 = vdwg.mxu0
    %v671 = vmax.f32 %v593, 0.0
    %v672 = vmax.f32 %v595, 0.0
    %v673 = vmax.f32 %v597, 0.0
    %v674 = vmax.f32 %v599, 0.0
    %v675 = vmax.f32 %v603, 0.0
    %v676 = vmax.f32 %v605, 0.0
    %v677 = vmax.f32 %v607, 0.0
    %v678 = vmax.f32 %v609, 0.0
    %v679 = vmax.f32 %v613, 0.0
    %v680 = vmax.f32 %v615, 0.0
    %v681 = vmax.f32 %v617, 0.0
    %v682 = vmax.f32 %v619, 0.0
    %v683 = vmax.f32 %v623, 0.0
    %v684 = vmax.f32 %v625, 0.0
    %v685 = vmax.f32 %v627, 0.0
    %v686 = vmax.f32 %v629, 0.0
    %v687 = vmax.f32 %v633, 0.0
    %v688 = vmax.f32 %v635, 0.0
    %v689 = vmax.f32 %v637, 0.0
    %v690 = vmax.f32 %v639, 0.0
    %v691 = vmax.f32 %v643, 0.0
    %v692 = vmax.f32 %v645, 0.0
    %v693 = vmax.f32 %v647, 0.0
    %v694 = vmax.f32 %v649, 0.0
    %v695 = vmax.f32 %v653, 0.0
    %v696 = vmax.f32 %v655, 0.0
    %v697 = vmax.f32 %v657, 0.0
    %v698 = vmax.f32 %v659, 0.0
    %v699 = vmax.f32 %v663, 0.0
    %v700 = vmax.f32 %v665, 0.0
    %v701 = vmax.f32 %v667, 0.0
    %v702 = vmax.f32 %v669, 0.0
    %v703 = vpack.c.bf16 %v673, %v671
    %v704 = vpack.c.bf16 %v674, %v672
    %v705 = vpack.c.bf16 %v677, %v675
    %v706 = vpack.c.bf16 %v678, %v676
    %v707 = vpack.c.bf16 %v681, %v679
    %v708 = vpack.c.bf16 %v682, %v680
    %v709 = vpack.c.bf16 %v685, %v683
    %v710 = vpack.c.bf16 %v686, %v684
    %v711 = vpack.c.bf16 %v689, %v687
    %v712 = vpack.c.bf16 %v690, %v688
    %v713 = vpack.c.bf16 %v693, %v691
    %v714 = vpack.c.bf16 %v694, %v692
    %v715 = vpack.c.bf16 %v697, %v695
    %v716 = vpack.c.bf16 %v698, %v696
    %v717 = vpack.c.bf16 %v701, %v699
    %v718 = vpack.c.bf16 %v702, %v700
    %v719 = vld [vmem:[#allocation5] sm:$0xff]
    %v720 = vld [vmem:[#allocation5 + $0x8] sm:$0xff]
    %v721 = vld [vmem:[#allocation5 + $0x10] sm:$0xff]
    %v722 = vld [vmem:[#allocation5 + $0x18] sm:$0xff]
    %v723 = vld [vmem:[#allocation5 + $0x20] sm:$0xff]
    %v724 = vld [vmem:[#allocation5 + $0x28] sm:$0xff]
    %v725 = vld [vmem:[#allocation5 + $0x30] sm:$0xff]
    %v726 = vld [vmem:[#allocation5 + $0x38] sm:$0xff]
    %v727 = vld [vmem:[#allocation5 + $0x40] sm:$0xff]
    %v728 = vld [vmem:[#allocation5 + $0x48] sm:$0xff]
    %v729 = vld [vmem:[#allocation5 + $0x50] sm:$0xff]
    %v730 = vld [vmem:[#allocation5 + $0x58] sm:$0xff]
    %v731 = vld [vmem:[#allocation5 + $0x60] sm:$0xff]
    %v732 = vld [vmem:[#allocation5 + $0x68] sm:$0xff]
    %v733 = vld [vmem:[#allocation5 + $0x70] sm:$0xff]
    %v734 = vld [vmem:[#allocation5 + $0x78] sm:$0xff]
    %v735 = vld [vmem:[#allocation5 + $0x80] sm:$0xff]
    %v736 = vld [vmem:[#allocation5 + $0x88] sm:$0xff]
    %v737 = vld [vmem:[#allocation5 + $0x90] sm:$0xff]
    %v738 = vld [vmem:[#allocation5 + $0x98] sm:$0xff]
    %v739 = vld [vmem:[#allocation5 + $0xa0] sm:$0xff]
    %v740 = vld [vmem:[#allocation5 + $0xa8] sm:$0xff]
    %v741 = vld [vmem:[#allocation5 + $0xb0] sm:$0xff]
    %v742 = vld [vmem:[#allocation5 + $0xb8] sm:$0xff]
    %v743 = vld [vmem:[#allocation5 + $0xc0] sm:$0xff]
    %v744 = vld [vmem:[#allocation5 + $0xc8] sm:$0xff]
    %v745 = vld [vmem:[#allocation5 + $0xd0] sm:$0xff]
    %v746 = vld [vmem:[#allocation5 + $0xd8] sm:$0xff]
    %v747 = vld [vmem:[#allocation5 + $0xe0] sm:$0xff]
    %v748 = vld [vmem:[#allocation5 + $0xe8] sm:$0xff]
    %v749 = vld [vmem:[#allocation5 + $0xf0] sm:$0xff]
    %v750 = vld [vmem:[#allocation5 + $0xf8] sm:$0xff]
    %v751 = vld [vmem:[%s6] sm:$0x3]
    %v753 = vlaneseq
    %v754 = vshrl.u32 %v753, 7
    %v755 = vsub.s32 0, %v754
    %v756 = vrot.slane %v751, %v755
    %v757 = vlaneseq
    %v758 = vshrl.u32 %v757, 7
    %v759 = vsub.s32 1, %v758
    %v760 = vrot.slane %v751, %v759
    %v795 = vunpack.c.l.b16 %v719
    %v796 = vunpack.c.h.b16 %v719
    %v797 = vunpack.c.l.b16 %v720
    %v798 = vunpack.c.h.b16 %v720
    %v799 = vunpack.c.l.b16 %v721
    %v800 = vunpack.c.h.b16 %v721
    %v801 = vunpack.c.l.b16 %v722
    %v802 = vunpack.c.h.b16 %v722
    %v803 = vunpack.c.l.b16 %v723
    %v804 = vunpack.c.h.b16 %v723
    %v805 = vunpack.c.l.b16 %v724
    %v806 = vunpack.c.h.b16 %v724
    %v807 = vunpack.c.l.b16 %v725
    %v808 = vunpack.c.h.b16 %v725
    %v809 = vunpack.c.l.b16 %v726
    %v810 = vunpack.c.h.b16 %v726
    %v811 = vunpack.c.l.b16 %v727
    %v812 = vunpack.c.h.b16 %v727
    %v813 = vunpack.c.l.b16 %v728
    %v814 = vunpack.c.h.b16 %v728
    %v815 = vunpack.c.l.b16 %v729
    %v816 = vunpack.c.h.b16 %v729
    %v817 = vunpack.c.l.b16 %v730
    %v818 = vunpack.c.h.b16 %v730
    %v819 = vunpack.c.l.b16 %v731
    %v820 = vunpack.c.h.b16 %v731
    %v821 = vunpack.c.l.b16 %v732
    %v822 = vunpack.c.h.b16 %v732
    %v823 = vunpack.c.l.b16 %v733
    %v824 = vunpack.c.h.b16 %v733
    %v825 = vunpack.c.l.b16 %v734
    %v826 = vunpack.c.h.b16 %v734
    %v827 = vunpack.c.l.b16 %v735
    %v828 = vunpack.c.h.b16 %v735
    %v829 = vunpack.c.l.b16 %v736
    %v830 = vunpack.c.h.b16 %v736
    %v831 = vunpack.c.l.b16 %v737
    %v832 = vunpack.c.h.b16 %v737
    %v833 = vunpack.c.l.b16 %v738
    %v834 = vunpack.c.h.b16 %v738
    %v835 = vunpack.c.l.b16 %v739
    %v836 = vunpack.c.h.b16 %v739
    %v837 = vunpack.c.l.b16 %v740
    %v838 = vunpack.c.h.b16 %v740
    %v839 = vunpack.c.l.b16 %v741
    %v840 = vunpack.c.h.b16 %v741
    %v841 = vunpack.c.l.b16 %v742
    %v842 = vunpack.c.h.b16 %v742
    %v843 = vunpack.c.l.b16 %v743
    %v844 = vunpack.c.h.b16 %v743
    %v845 = vunpack.c.l.b16 %v744
    %v846 = vunpack.c.h.b16 %v744
    %v847 = vunpack.c.l.b16 %v745
    %v848 = vunpack.c.h.b16 %v745
    %v849 = vunpack.c.l.b16 %v746
    %v850 = vunpack.c.h.b16 %v746
    %v851 = vunpack.c.l.b16 %v747
    %v852 = vunpack.c.h.b16 %v747
    %v853 = vunpack.c.l.b16 %v748
    %v854 = vunpack.c.h.b16 %v748
    %v855 = vunpack.c.l.b16 %v749
    %v856 = vunpack.c.h.b16 %v749
    %v857 = vunpack.c.l.b16 %v750
    %v858 = vunpack.c.h.b16 %v750
    %v859 = vpack.c.b16 %v797, %v795
    %v860 = vpack.c.b16 %v798, %v796
    %v861 = vpack.c.b16 %v801, %v799
    %v862 = vpack.c.b16 %v802, %v800
    %v863 = vpack.c.b16 %v805, %v803
    %v864 = vpack.c.b16 %v806, %v804
    %v865 = vpack.c.b16 %v809, %v807
    %v866 = vpack.c.b16 %v810, %v808
    %v867 = vpack.c.b16 %v813, %v811
    %v868 = vpack.c.b16 %v814, %v812
    %v869 = vpack.c.b16 %v817, %v815
    %v870 = vpack.c.b16 %v818, %v816
    %v871 = vpack.c.b16 %v821, %v819
    %v872 = vpack.c.b16 %v822, %v820
    %v873 = vpack.c.b16 %v825, %v823
    %v874 = vpack.c.b16 %v826, %v824
    %v875 = vpack.c.b16 %v829, %v827
    %v876 = vpack.c.b16 %v830, %v828
    %v877 = vpack.c.b16 %v833, %v831
    %v878 = vpack.c.b16 %v834, %v832
    %v879 = vpack.c.b16 %v837, %v835
    %v880 = vpack.c.b16 %v838, %v836
    %v881 = vpack.c.b16 %v841, %v839
    %v882 = vpack.c.b16 %v842, %v840
    %v883 = vpack.c.b16 %v845, %v843
    %v884 = vpack.c.b16 %v846, %v844
    %v885 = vpack.c.b16 %v849, %v847
    %v886 = vpack.c.b16 %v850, %v848
    %v887 = vpack.c.b16 %v853, %v851
    %v888 = vpack.c.b16 %v854, %v852
    %v889 = vpack.c.b16 %v857, %v855
    %v890 = vpack.c.b16 %v858, %v856
    %923 = vmatprep.subr.bf16.mxu0 %v874
    %924 = vmatpush1.bf16.msra.mxu0 %v873
    %925 = vmatprep.subr.bf16.mxu0 %v872
    %926 = vmatpush1.bf16.msra.mxu0 %v871
    %927 = vmatprep.subr.bf16.mxu0 %v870
    %928 = vmatpush1.bf16.msra.mxu0 %v869
    %929 = vmatprep.subr.bf16.mxu0 %v868
    %930 = vmatpush1.bf16.msra.mxu0 %v867
    %931 = vmatprep.subr.bf16.mxu0 %v866
    %932 = vmatpush1.bf16.msra.mxu0 %v865
    %933 = vmatprep.subr.bf16.mxu0 %v864
    %934 = vmatpush1.bf16.msra.mxu0 %v863
    %935 = vmatprep.subr.bf16.mxu0 %v862
    %936 = vmatpush1.bf16.msra.mxu0 %v861
    %937 = vmatprep.subr.bf16.mxu0 %v860
    %938 = vmatpush1.bf16.msra.mxu0 %v859
    %939 = vmatprep.subr.bf16.mxu0 %v890
    %940 = vmatpush2.bf16.msra.mxu0 %v889
    %941 = vmatprep.subr.bf16.mxu0 %v888
    %942 = vmatpush2.bf16.msra.mxu0 %v887
    %943 = vmatprep.subr.bf16.mxu0 %v886
    %944 = vmatpush2.bf16.msra.mxu0 %v885
    %945 = vmatprep.subr.bf16.mxu0 %v884
    %946 = vmatpush2.bf16.msra.mxu0 %v883
    %947 = vmatprep.subr.bf16.mxu0 %v882
    %948 = vmatpush2.bf16.msra.mxu0 %v881
    %949 = vmatprep.subr.bf16.mxu0 %v880
    %950 = vmatpush2.bf16.msra.mxu0 %v879
    %951 = vmatprep.subr.bf16.mxu0 %v878
    %952 = vmatpush2.bf16.msra.mxu0 %v877
    %953 = vmatprep.subr.bf16.mxu0 %v876
    %954 = vmatpush2.bf16.msra.mxu0 %v875
    %955 = vmatprep.mubr.bf16.mxu0 %v704
    %956 = vmatmul.mubr.bf16.gmra.mxu0 %v703
    %v957 = vpop.f32.mrf.mxu0
    %v958 = vadd.f32 %v756, %v957
    %v959 = vpop.f32.mrf.mxu0
    %v960 = vadd.f32 %v760, %v959
    %v961 = vpop.f32.mrf.mxu0
    %v962 = vadd.f32 %v756, %v961
    %v963 = vpop.f32.mrf.mxu0
    %v964 = vadd.f32 %v760, %v963
    %965 = vmatprep.mubr.bf16.mxu0 %v706
    %966 = vmatmul.mubr.bf16.gmra.mxu0 %v705
    %v967 = vpop.f32.mrf.mxu0
    %v968 = vadd.f32 %v756, %v967
    %v969 = vpop.f32.mrf.mxu0
    %v970 = vadd.f32 %v760, %v969
    %v971 = vpop.f32.mrf.mxu0
    %v972 = vadd.f32 %v756, %v971
    %v973 = vpop.f32.mrf.mxu0
    %v974 = vadd.f32 %v760, %v973
    %975 = vmatprep.mubr.bf16.mxu0 %v708
    %976 = vmatmul.mubr.bf16.gmra.mxu0 %v707
    %v977 = vpop.f32.mrf.mxu0
    %v978 = vadd.f32 %v756, %v977
    %v979 = vpop.f32.mrf.mxu0
    %v980 = vadd.f32 %v760, %v979
    %v981 = vpop.f32.mrf.mxu0
    %v982 = vadd.f32 %v756, %v981
    %v983 = vpop.f32.mrf.mxu0
    %v984 = vadd.f32 %v760, %v983
    %985 = vmatprep.mubr.bf16.mxu0 %v710
    %986 = vmatmul.mubr.bf16.gmra.mxu0 %v709
    %v987 = vpop.f32.mrf.mxu0
    %v988 = vadd.f32 %v756, %v987
    %v989 = vpop.f32.mrf.mxu0
    %v990 = vadd.f32 %v760, %v989
    %v991 = vpop.f32.mrf.mxu0
    %v992 = vadd.f32 %v756, %v991
    %v993 = vpop.f32.mrf.mxu0
    %v994 = vadd.f32 %v760, %v993
    %995 = vmatprep.mubr.bf16.mxu0 %v712
    %996 = vmatmul.mubr.bf16.gmra.mxu0 %v711
    %v997 = vpop.f32.mrf.mxu0
    %v998 = vadd.f32 %v756, %v997
    %v999 = vpop.f32.mrf.mxu0
    %v1000 = vadd.f32 %v760, %v999
    %v1001 = vpop.f32.mrf.mxu0
    %v1002 = vadd.f32 %v756, %v1001
    %v1003 = vpop.f32.mrf.mxu0
    %v1004 = vadd.f32 %v760, %v1003
    %1005 = vmatprep.mubr.bf16.mxu0 %v714
    %1006 = vmatmul.mubr.bf16.gmra.mxu0 %v713
    %v1007 = vpop.f32.mrf.mxu0
    %v1008 = vadd.f32 %v756, %v1007
    %v1009 = vpop.f32.mrf.mxu0
    %v1010 = vadd.f32 %v760, %v1009
    %v1011 = vpop.f32.mrf.mxu0
    %v1012 = vadd.f32 %v756, %v1011
    %v1013 = vpop.f32.mrf.mxu0
    %v1014 = vadd.f32 %v760, %v1013
    %1015 = vmatprep.mubr.bf16.mxu0 %v716
    %1016 = vmatmul.mubr.bf16.gmra.mxu0 %v715
    %v1017 = vpop.f32.mrf.mxu0
    %v1018 = vadd.f32 %v756, %v1017
    %v1019 = vpop.f32.mrf.mxu0
    %v1020 = vadd.f32 %v760, %v1019
    %v1021 = vpop.f32.mrf.mxu0
    %v1022 = vadd.f32 %v756, %v1021
    %v1023 = vpop.f32.mrf.mxu0
    %v1024 = vadd.f32 %v760, %v1023
    %1025 = vmatprep.mubr.bf16.mxu0 %v718
    %1026 = vmatmul.mubr.bf16.gmra.mxu0 %v717
    %v1027 = vpop.f32.mrf.mxu0
    %v1028 = vadd.f32 %v756, %v1027
    %v1029 = vpop.f32.mrf.mxu0
    %v1030 = vadd.f32 %v760, %v1029
    %v1031 = vpop.f32.mrf.mxu0
    %v1032 = vadd.f32 %v756, %v1031
    %v1033 = vpop.f32.mrf.mxu0
    %v1034 = vadd.f32 %v760, %v1033
    %1035 = vdwg.mxu0
    %v1036 = vmax.f32 %v958, 0.0
    %v1037 = vmax.f32 %v960, 0.0
    %v1038 = vmax.f32 %v962, 0.0
    %v1039 = vmax.f32 %v964, 0.0
    %v1040 = vmax.f32 %v968, 0.0
    %v1041 = vmax.f32 %v970, 0.0
    %v1042 = vmax.f32 %v972, 0.0
    %v1043 = vmax.f32 %v974, 0.0
    %v1044 = vmax.f32 %v978, 0.0
    %v1045 = vmax.f32 %v980, 0.0
    %v1046 = vmax.f32 %v982, 0.0
    %v1047 = vmax.f32 %v984, 0.0
    %v1048 = vmax.f32 %v988, 0.0
    %v1049 = vmax.f32 %v990, 0.0
    %v1050 = vmax.f32 %v992, 0.0
    %v1051 = vmax.f32 %v994, 0.0
    %v1052 = vmax.f32 %v998, 0.0
    %v1053 = vmax.f32 %v1000, 0.0
    %v1054 = vmax.f32 %v1002, 0.0
    %v1055 = vmax.f32 %v1004, 0.0
    %v1056 = vmax.f32 %v1008, 0.0
    %v1057 = vmax.f32 %v1010, 0.0
    %v1058 = vmax.f32 %v1012, 0.0
    %v1059 = vmax.f32 %v1014, 0.0
    %v1060 = vmax.f32 %v1018, 0.0
    %v1061 = vmax.f32 %v1020, 0.0
    %v1062 = vmax.f32 %v1022, 0.0
    %v1063 = vmax.f32 %v1024, 0.0
    %v1064 = vmax.f32 %v1028, 0.0
    %v1065 = vmax.f32 %v1030, 0.0
    %v1066 = vmax.f32 %v1032, 0.0
    %v1067 = vmax.f32 %v1034, 0.0
    %v1068 = vld [vmem:[%s7] sm:$0x3]
    %v1070 = vlaneseq
    %v1071 = vshrl.u32 %v1070, 7
    %v1072 = vsub.s32 0, %v1071
    %v1073 = vrot.slane %v1068, %v1072
    %v1074 = vlaneseq
    %v1075 = vshrl.u32 %v1074, 7
    %v1076 = vsub.s32 1, %v1075
    %v1077 = vrot.slane %v1068, %v1076
    %v1080 = vmul.f32 %v1036, %v1073
    %v1081 = vmul.f32 %v1037, %v1077
    %v1082 = vmul.f32 %v1038, %v1073
    %v1083 = vmul.f32 %v1039, %v1077
    %v1084 = vmul.f32 %v1040, %v1073
    %v1085 = vmul.f32 %v1041, %v1077
    %v1086 = vmul.f32 %v1042, %v1073
    %v1087 = vmul.f32 %v1043, %v1077
    %v1088 = vmul.f32 %v1044, %v1073
    %v1089 = vmul.f32 %v1045, %v1077
    %v1090 = vmul.f32 %v1046, %v1073
    %v1091 = vmul.f32 %v1047, %v1077
    %v1092 = vmul.f32 %v1048, %v1073
    %v1093 = vmul.f32 %v1049, %v1077
    %v1094 = vmul.f32 %v1050, %v1073
    %v1095 = vmul.f32 %v1051, %v1077
    %v1096 = vmul.f32 %v1052, %v1073
    %v1097 = vmul.f32 %v1053, %v1077
    %v1098 = vmul.f32 %v1054, %v1073
    %v1099 = vmul.f32 %v1055, %v1077
    %v1100 = vmul.f32 %v1056, %v1073
    %v1101 = vmul.f32 %v1057, %v1077
    %v1102 = vmul.f32 %v1058, %v1073
    %v1103 = vmul.f32 %v1059, %v1077
    %v1104 = vmul.f32 %v1060, %v1073
    %v1105 = vmul.f32 %v1061, %v1077
    %v1106 = vmul.f32 %v1062, %v1073
    %v1107 = vmul.f32 %v1063, %v1077
    %v1108 = vmul.f32 %v1064, %v1073
    %v1109 = vmul.f32 %v1065, %v1077
    %v1110 = vmul.f32 %v1066, %v1073
    %v1111 = vmul.f32 %v1067, %v1077
    %v1112 = vadd.f32 %v1080, %v1081
    %1113 = vadd.xlane.f32.xlu0 %v1112
    %v1114 = vpop.xlane.xlu0 %1113
    %v1115 = vadd.f32 %v1082, %v1083
    %1116 = vadd.xlane.f32.xlu0 %v1115
    %v1117 = vpop.xlane.xlu0 %1116
    %v1118 = vadd.f32 %v1084, %v1085
    %1119 = vadd.xlane.f32.xlu0 %v1118
    %v1120 = vpop.xlane.xlu0 %1119
    %v1121 = vadd.f32 %v1086, %v1087
    %1122 = vadd.xlane.f32.xlu0 %v1121
    %v1123 = vpop.xlane.xlu0 %1122
    %v1124 = vadd.f32 %v1088, %v1089
    %1125 = vadd.xlane.f32.xlu0 %v1124
    %v1126 = vpop.xlane.xlu0 %1125
    %v1127 = vadd.f32 %v1090, %v1091
    %1128 = vadd.xlane.f32.xlu0 %v1127
    %v1129 = vpop.xlane.xlu0 %1128
    %v1130 = vadd.f32 %v1092, %v1093
    %1131 = vadd.xlane.f32.xlu0 %v1130
    %v1132 = vpop.xlane.xlu0 %1131
    %v1133 = vadd.f32 %v1094, %v1095
    %1134 = vadd.xlane.f32.xlu0 %v1133
    %v1135 = vpop.xlane.xlu0 %1134
    %v1136 = vadd.f32 %v1096, %v1097
    %1137 = vadd.xlane.f32.xlu0 %v1136
    %v1138 = vpop.xlane.xlu0 %1137
    %v1139 = vadd.f32 %v1098, %v1099
    %1140 = vadd.xlane.f32.xlu0 %v1139
    %v1141 = vpop.xlane.xlu0 %1140
    %v1142 = vadd.f32 %v1100, %v1101
    %1143 = vadd.xlane.f32.xlu0 %v1142
    %v1144 = vpop.xlane.xlu0 %1143
    %v1145 = vadd.f32 %v1102, %v1103
    %1146 = vadd.xlane.f32.xlu0 %v1145
    %v1147 = vpop.xlane.xlu0 %1146
    %v1148 = vadd.f32 %v1104, %v1105
    %1149 = vadd.xlane.f32.xlu0 %v1148
    %v1150 = vpop.xlane.xlu0 %1149
    %v1151 = vadd.f32 %v1106, %v1107
    %1152 = vadd.xlane.f32.xlu0 %v1151
    %v1153 = vpop.xlane.xlu0 %1152
    %v1154 = vadd.f32 %v1108, %v1109
    %1155 = vadd.xlane.f32.xlu0 %v1154
    %v1156 = vpop.xlane.xlu0 %1155
    %v1157 = vadd.f32 %v1110, %v1111
    %1158 = vadd.xlane.f32.xlu0 %v1157
    %v1159 = vpop.xlane.xlu0 %1158
    %v1160 = vld [vmem:[#allocation2] sm:$0x1]
    %v1162 = vlaneseq
    %v1163 = vshrl.u32 %v1162, 7
    %v1164 = vsub.s32 0, %v1163
    %v1165 = vrot.slane %v1160, %v1164
    %v1167 = vadd.f32 %v1114, %v1165
    %v1168 = vadd.f32 %v1117, %v1165
    %v1169 = vadd.f32 %v1120, %v1165
    %v1170 = vadd.f32 %v1123, %v1165
    %v1171 = vadd.f32 %v1126, %v1165
    %v1172 = vadd.f32 %v1129, %v1165
    %v1173 = vadd.f32 %v1132, %v1165
    %v1174 = vadd.f32 %v1135, %v1165
    %v1175 = vadd.f32 %v1138, %v1165
    %v1176 = vadd.f32 %v1141, %v1165
    %v1177 = vadd.f32 %v1144, %v1165
    %v1178 = vadd.f32 %v1147, %v1165
    %v1179 = vadd.f32 %v1150, %v1165
    %v1180 = vadd.f32 %v1153, %v1165
    %v1181 = vadd.f32 %v1156, %v1165
    %v1182 = vadd.f32 %v1159, %v1165
    %vm1183 = vcmask 7168
    %1184 = vst.msk [vmem:[%s9] sm:$0xff] %vm1183, %v1167
    %1185 = vst.msk [vmem:[%s9 + $0x8] sm:$0xff] %vm1183, %v1168
    %1186 = vst.msk [vmem:[%s9 + $0x10] sm:$0xff] %vm1183, %v1169
    %1187 = vst.msk [vmem:[%s9 + $0x18] sm:$0xff] %vm1183, %v1170
    %1188 = vst.msk [vmem:[%s9 + $0x20] sm:$0xff] %vm1183, %v1171
    %1189 = vst.msk [vmem:[%s9 + $0x28] sm:$0xff] %vm1183, %v1172
    %1190 = vst.msk [vmem:[%s9 + $0x30] sm:$0xff] %vm1183, %v1173
    %1191 = vst.msk [vmem:[%s9 + $0x38] sm:$0xff] %vm1183, %v1174
    %1192 = vst.msk [vmem:[%s9 + $0x40] sm:$0xff] %vm1183, %v1175
    %1193 = vst.msk [vmem:[%s9 + $0x48] sm:$0xff] %vm1183, %v1176
    %1194 = vst.msk [vmem:[%s9 + $0x50] sm:$0xff] %vm1183, %v1177
    %1195 = vst.msk [vmem:[%s9 + $0x58] sm:$0xff] %vm1183, %v1178
    %1196 = vst.msk [vmem:[%s9 + $0x60] sm:$0xff] %vm1183, %v1179
    %1197 = vst.msk [vmem:[%s9 + $0x68] sm:$0xff] %vm1183, %v1180
    %1198 = vst.msk [vmem:[%s9 + $0x70] sm:$0xff] %vm1183, %v1181
    %1199 = vst.msk [vmem:[%s9 + $0x78] sm:$0xff] %vm1183, %v1182
    // Predicated region
    $region46: #{tpu_custom_call.1} parent=1 // pred_check
      _
    $region47: #{tpu_custom_call.1} parent=1 // pred_check_branch
      %1201 = sbr.rel (0) target = $region49
    $region48: #{tpu_custom_call.1} parent=1 // pred_region
      _
    $region49: #{tpu_custom_call.1} parent=1 // pred_fallthru
      _
    // Predicated region
    $region50: #{tpu_custom_call.1} parent=1 // pred_check
      _
    $region51: #{tpu_custom_call.1} parent=1 // pred_check_branch
      %1203 = sbr.rel (0) target = $region53
    $region52: #{tpu_custom_call.1} parent=1 // pred_region
      _
    $region53: #{tpu_custom_call.1} parent=1 // pred_fallthru
      _
    %1204 = vsyncpa [#allocation4], 1
    %1205 = vsyncpa [#allocation6], 1

</llo_original>
